<compile_context>
chip_gen: v7x
topology: tpu7x:2x2x1
jax: 0.10.0
libtpu: 0.0.40
codegen_flags: <defaults>
</compile_context>

<pallas_src>
import jax
import jax.numpy as jnp
import numpy as np
from jax.experimental import pallas as pl
from jax.experimental.pallas import tpu as pltpu


def attention_kernel(h_ref, enc_ref, whT_ref, weT_ref, b_ref, v_ref, out_ref):
    # h_ref:   (B, H)     bf16 last-layer decoder hidden state
    # enc_ref: (S*B, 2H)  bf16 encoder outputs, s-major flattening of (S, B, 2H)
    # whT_ref: (H, H)     bf16 hidden-slice of attention weight, pre-transposed (in, out)
    # weT_ref: (2H, H)    bf16 encoder-slice of attention weight, pre-transposed (in, out)
    # b_ref:   (1, H)     f32 attention bias
    # v_ref:   (1, H)     f32 scoring vector
    # out_ref: (B, S)     f32 softmax attention weights (lane-dense block)
    bsz = h_ref.shape[0]
    sb = enc_ref.shape[0]
    s_len = sb // bsz
    hdim = whT_ref.shape[1]

    # bf16 MXU matmuls with f32 accumulation; weights are already (in, out) so
    # this is a standard (M,K)@(K,N) contraction with no in-kernel relayout.
    th = jnp.dot(h_ref[...], whT_ref[...],
                 preferred_element_type=jnp.float32)              # (B, H)
    th = th + b_ref[...]                                          # fold bias once
    te = jnp.dot(enc_ref[...], weT_ref[...],
                 preferred_element_type=jnp.float32)              # (S*B, H)

    # Rows of te are s-major (row s*B + b); replicate the (B, H) hidden
    # projection across S via a stride-0 broadcast (no S-operand concat).
    th_rep = jnp.broadcast_to(th[None, :, :], (s_len, bsz, hdim)).reshape(sb, hdim)

    energy = jnp.tanh(te + th_rep)                                # (S*B, H) f32

    # v-scoring: VPU multiply + lane reduction (keeps the MXU free of an
    # N=1 matmul).
    scores_col = jnp.sum(energy * v_ref[...], axis=1, keepdims=True)  # (S*B, 1)

    # Rearrange the s-major column into (B, S) so the softmax reduction runs
    # along the lane axis and the store is a single lane-contiguous block.
    scores_bs = jnp.transpose(scores_col.reshape(s_len, bsz))     # (B, S)

    m = jnp.max(scores_bs, axis=1, keepdims=True)
    e = jnp.exp(scores_bs - m)
    denom = jnp.sum(e, axis=1, keepdims=True)
    p = e * pl.reciprocal(denom, approx=True)                     # EUP divide
    out_ref[...] = p.astype(out_ref.dtype)


def prepare_attention_params(w_attn, b_attn, v_w):
    """One-time parameter prep (hoisted out of the per-decode-step call path):
    slice the fused attention weight, transpose to (in, out), cast to bf16."""
    H = w_attn.shape[0]
    wh_t = jnp.asarray(w_attn[:, :H].T, dtype=jnp.bfloat16)   # (H, H)
    we_t = jnp.asarray(w_attn[:, H:].T, dtype=jnp.bfloat16)   # (2H, H)
    b2 = jnp.asarray(b_attn.reshape(1, H), dtype=jnp.float32)
    v2 = jnp.asarray(v_w.reshape(1, H), dtype=jnp.float32)
    return wh_t, we_t, b2, v2


@jax.jit
def attention_forward(hidden, enc_outputs, wh_t, we_t, b2, v2):
    """hidden: (L, B, H), enc_outputs: (S, B, 2H); weights from
    prepare_attention_params.  Returns (B, S) softmax attention weights."""
    L, B, H = hidden.shape
    S, _, E = enc_outputs.shape  # E == 2 * H

    h_last = hidden[-1].astype(jnp.bfloat16)                   # (B, H)
    # Contiguous reshape (no HBM transpose of the largest input); bf16 halves
    # the HBM->VMEM traffic for the dominant operand.
    enc_flat = enc_outputs.reshape(S * B, E).astype(jnp.bfloat16)

    out = pl.pallas_call(
        attention_kernel,
        out_shape=jax.ShapeDtypeStruct((B, S), jnp.float32),
        compiler_params=pltpu.CompilerParams(
            vmem_limit_bytes=64 * 1024 * 1024),
    )(h_last, enc_flat, wh_t, we_t, b2, v2)
    return out


def attention_ref(hidden, enc_outputs, w_attn, b_attn, v_w):
    """Pure-JAX f32 reference that mirrors the PyTorch forward exactly."""
    h = hidden[-1]                                       # (B, H)
    S = enc_outputs.shape[0]
    h_rep = jnp.repeat(h[:, None, :], S, axis=1)         # (B, S, H)
    enc = jnp.transpose(enc_outputs, (1, 0, 2))          # (B, S, 2H)
    cat = jnp.concatenate([h_rep, enc], axis=2)          # (B, S, 3H)
    energy = jnp.tanh(cat @ w_attn.T + b_attn)           # (B, S, H)
    attn = (energy @ v_w.T)[..., 0]                      # (B, S)
    return jax.nn.softmax(attn, axis=1)


if __name__ == "__main__":
    # Small shapes consistent with the module: Linear(3H -> H) implies encoder
    # feature dim = 2H (bidirectional encoder).
    H = 32      # hidden_size
    B = 2       # batch
    S = 8       # src_len
    L = 2       # decoder RNN layers (hidden[-1] takes the last)
    E = 2 * H   # encoder output feature dim

    key = jax.random.PRNGKey(0)
    k1, k2, k3, k4, k5 = jax.random.split(key, 5)

    # Deterministic parameter init (PyTorch nn.Linear-style uniform bounds).
    bound_a = 1.0 / np.sqrt(3 * H)
    w_attn = jax.random.uniform(k1, (H, 3 * H), jnp.float32, -bound_a, bound_a)
    b_attn = jax.random.uniform(k2, (H,), jnp.float32, -bound_a, bound_a)
    bound_v = 1.0 / np.sqrt(H)
    v_w = jax.random.uniform(k3, (1, H), jnp.float32, -bound_v, bound_v)

    hidden = jax.random.normal(k4, (L, B, H), jnp.float32)
    enc_outputs = jax.random.normal(k5, (S, B, E), jnp.float32)

    # Static weights are prepared once for the whole decode loop.
    wh_t, we_t, b2, v2 = prepare_attention_params(w_attn, b_attn, v_w)

    out = attention_forward(hidden, enc_outputs, wh_t, we_t, b2, v2)
    out = jax.block_until_ready(out)

    ref = attention_ref(hidden, enc_outputs, w_attn, b_attn, v_w)
    assert out.shape == (B, S)
    # bf16 MXU operands -> relaxed tolerance vs. the f32 reference.
    np.testing.assert_allclose(np.asarray(out), np.asarray(ref),
                               rtol=2e-2, atol=2e-2)
    print("KERNEL_OK")
</pallas_src>

<mosaic_0001>
module attributes {stable_mosaic.version = 11 : i64} {
  func.func @attention_kernel(%arg0: memref<2x32xbf16, #tpu.memory_space<vmem>>, %arg1: memref<16x64xbf16, #tpu.memory_space<vmem>>, %arg2: memref<32x32xbf16, #tpu.memory_space<vmem>>, %arg3: memref<64x32xbf16, #tpu.memory_space<vmem>>, %arg4: memref<1x32xf32, #tpu.memory_space<vmem>>, %arg5: memref<1x32xf32, #tpu.memory_space<vmem>>, %arg6: memref<2x8xf32, #tpu.memory_space<vmem>>) attributes {dimension_semantics = [], scalar_prefetch = 0 : i64, scratch_operands = 0 : i64, tpu.core_type = #tpu.core_type<tc>} {
    %c0 = arith.constant 0 : index
    %c0_0 = arith.constant 0 : index
    %0 = vector.load %arg0[%c0, %c0_0] : memref<2x32xbf16, #tpu.memory_space<vmem>>, vector<2x32xbf16>
    %c0_1 = arith.constant 0 : index
    %c0_2 = arith.constant 0 : index
    %1 = vector.load %arg2[%c0_1, %c0_2] : memref<32x32xbf16, #tpu.memory_space<vmem>>, vector<32x32xbf16>
    %cst = arith.constant dense<0.000000e+00> : vector<2x32xf32>
    %2 = tpu.matmul %0, %1, %cst {dimension_numbers = #tpu.dot_dimension_numbers<[1], [0], [0], [1], [0, 0, 1, 1], [], []>} : vector<2x32xbf16>, vector<32x32xbf16>, vector<2x32xf32> -> vector<2x32xf32>
    %c0_3 = arith.constant 0 : index
    %c0_4 = arith.constant 0 : index
    %3 = vector.load %arg4[%c0_3, %c0_4] : memref<1x32xf32, #tpu.memory_space<vmem>>, vector<1x32xf32>
    %4 = vector.broadcast %3 : vector<1x32xf32> to vector<2x32xf32>
    %5 = arith.addf %2, %4 : vector<2x32xf32>
    %c0_5 = arith.constant 0 : index
    %c0_6 = arith.constant 0 : index
    %6 = vector.load %arg1[%c0_5, %c0_6] : memref<16x64xbf16, #tpu.memory_space<vmem>>, vector<16x64xbf16>
    %c0_7 = arith.constant 0 : index
    %c0_8 = arith.constant 0 : index
    %7 = vector.load %arg3[%c0_7, %c0_8] : memref<64x32xbf16, #tpu.memory_space<vmem>>, vector<64x32xbf16>
    %cst_9 = arith.constant dense<0.000000e+00> : vector<16x32xf32>
    %8 = tpu.matmul %6, %7, %cst_9 {dimension_numbers = #tpu.dot_dimension_numbers<[1], [0], [0], [1], [0, 0, 1, 1], [], []>} : vector<16x64xbf16>, vector<64x32xbf16>, vector<16x32xf32> -> vector<16x32xf32>
    %9 = vector.shape_cast %5 : vector<2x32xf32> to vector<1x2x32xf32>
    %10 = vector.shape_cast %9 : vector<1x2x32xf32> to vector<1x2x32xf32>
    %11 = vector.broadcast %10 : vector<1x2x32xf32> to vector<8x2x32xf32>
    %12 = vector.shape_cast %11 : vector<8x2x32xf32> to vector<16x32xf32>
    %13 = arith.addf %8, %12 : vector<16x32xf32>
    %14 = math.tanh %13 : vector<16x32xf32>
    %c0_10 = arith.constant 0 : index
    %c0_11 = arith.constant 0 : index
    %15 = vector.load %arg5[%c0_10, %c0_11] : memref<1x32xf32, #tpu.memory_space<vmem>>, vector<1x32xf32>
    %16 = vector.broadcast %15 : vector<1x32xf32> to vector<16x32xf32>
    %17 = arith.mulf %14, %16 : vector<16x32xf32>
    %cst_12 = arith.constant dense<0.000000e+00> : vector<16xf32>
    %18 = vector.multi_reduction <add>, %17, %cst_12 [1] : vector<16x32xf32> to vector<16xf32>
    %19 = vector.shape_cast %18 : vector<16xf32> to vector<16x1xf32>
    %20 = vector.shape_cast %19 : vector<16x1xf32> to vector<8x2xf32>
    %21 = tpu.transpose %20, [1, 0] : vector<8x2xf32> -> vector<2x8xf32>
    %cst_13 = arith.constant dense<0xFF800000> : vector<2xf32>
    %22 = vector.multi_reduction <maximumf>, %21, %cst_13 [1] : vector<2x8xf32> to vector<2xf32>
    %23 = vector.shape_cast %22 : vector<2xf32> to vector<2x1xf32>
    %24 = vector.broadcast %23 : vector<2x1xf32> to vector<2x8xf32>
    %25 = arith.subf %21, %24 : vector<2x8xf32>
    %26 = math.exp %25 : vector<2x8xf32>
    %cst_14 = arith.constant dense<0.000000e+00> : vector<2xf32>
    %27 = vector.multi_reduction <add>, %26, %cst_14 [1] : vector<2x8xf32> to vector<2xf32>
    %28 = vector.shape_cast %27 : vector<2xf32> to vector<2x1xf32>
    %29 = tpu.reciprocal %28 {approx = true} : vector<2x1xf32> -> vector<2x1xf32>
    %30 = vector.broadcast %29 : vector<2x1xf32> to vector<2x8xf32>
    %31 = arith.mulf %26, %30 : vector<2x8xf32>
    %c0_15 = arith.constant 0 : index
    %c0_16 = arith.constant 0 : index
    %32 = vector.load %arg6[%c0_15, %c0_16] : memref<2x8xf32, #tpu.memory_space<vmem>>, vector<2x8xf32>
    tpu.vector_store %arg6[%c0_15, %c0_16], %31 {strides = array<i32>} : memref<2x8xf32, #tpu.memory_space<vmem>>, vector<2x8xf32>,
    return
  }
}

</mosaic_0001>

<llo_original>
// kernel: attention_forward.1
$region0: #{attention_forward.1}
  #allocation0 [shape = 'u32[]', space=smem, size = 0x4, offset = 0x4, fixed_abs, tag = 'smem constant byte address 0x4 - core index']
  #allocation1 [shape = 'u32[144,128]{1,0:T(1,128)}', space=vmem, size = 0x12000, scoped, tag = 'internal scratch']
  %s0 = inlined_call_operand.hbm [shape: bf16[2,32], index: 0, kind: input, shape index: {}]
  %s1 = inlined_call_operand.hbm [shape: bf16[16,64], index: 1, kind: input, shape index: {}]
  %s2 = inlined_call_operand.hbm [shape: bf16[32,32], index: 2, kind: input, shape index: {}]
  %s3 = inlined_call_operand.hbm [shape: bf16[64,32], index: 3, kind: input, shape index: {}]
  %s4 = inlined_call_operand.hbm [shape: f32[1,32], index: 4, kind: input, shape index: {}]
  %s5 = inlined_call_operand.hbm [shape: f32[1,32], index: 5, kind: input, shape index: {}]
  %s6 = inlined_call_operand.hbm [shape: f32[2,8], index: 6, kind: output, shape index: {}]
  %s7 = sld [smem:[#allocation0]]
  $region58: #{attention_forward.1} parent=0
    _
  %s9 = ssub.s32 1, %s7
  %s10 = scalar_select 0, %s9, %s7
  $region1: #{attention_forward.1} parent=0
    #allocation2 [shape = 'u8[512]{0}', space=vmem, size = 0x400, scoped, tag = 'input window, operand 0, single buffered']
    #allocation3 [shape = 's32[1]{0}', space=sflag, size = 0x4, scoped, tag = 'scoped memory for attention_forward.1']
    #allocation4 [shape = 's32[1]{0}', space=sflag, size = 0x4, scoped, tag = 'scoped memory for attention_forward.1']
    #allocation5 [shape = 'u8[4096]{0}', space=vmem, size = 0x1000, scoped, tag = 'input window, operand 1, single buffered']
    #allocation6 [shape = 's32[1]{0}', space=sflag, size = 0x4, scoped, tag = 'scoped memory for attention_forward.1']
    #allocation7 [shape = 'u8[8192]{0}', space=vmem, size = 0x2000, scoped, tag = 'input window, operand 2, single buffered']
    #allocation8 [shape = 'u8[16384]{0}', space=vmem, size = 0x4000, scoped, tag = 'input window, operand 3, single buffered']
    #allocation9 [shape = 's32[1]{0}', space=sflag, size = 0x4, scoped, tag = 'scoped memory for attention_forward.1']
    #allocation10 [shape = 'u8[512]{0}', space=vmem, size = 0x400, scoped, tag = 'input window, operand 4, single buffered']
    #allocation11 [shape = 'u8[512]{0}', space=vmem, size = 0x400, scoped, tag = 'input window, operand 5, single buffered']
    #allocation12 [shape = 's32[1]{0}', space=sflag, size = 0x4, scoped, tag = 'scoped memory for attention_forward.1']
    #allocation13 [shape = 'u8[1024]{0}', space=vmem, size = 0x400, scoped, tag = 'output window, operand 0, single buffered']
    %11 = vsyncpa [#allocation3], 0
    %12 = vsyncpa [#allocation6], 0
    %13 = vsyncpa [#allocation9], 0
    %14 = vsyncpa [#allocation12], 0
    %15 = vsyncpa [#allocation4], 0
    // Predicated region
    $region2: #{attention_forward.1} parent=1 // pred_check
      _
    $region3: #{attention_forward.1} parent=1 // pred_check_branch
      %17 = sbr.rel (0) target = $region5
    $region4: #{attention_forward.1} parent=1 // pred_region
      %s19 = ssub.s32 16, 16
      %20 = vsyncadd [#allocation3], %s19
      %s22 = sshll.u32 [#allocation2], 4
      %s23 = int_to_ptr.vmem [resolvable:$true] %s22
      %25 = dma.hbm_to_vmem [thread:$0]  %s0, 16, %s23, [#allocation3]
    $region5: #{attention_forward.1} parent=1 // pred_fallthru
      _
    // Predicated region
    $region6: #{attention_forward.1} parent=1 // pred_check
      _
    $region7: #{attention_forward.1} parent=1 // pred_check_branch
      %27 = sbr.rel (0) target = $region9
    $region8: #{attention_forward.1} parent=1 // pred_region
      %s29 = ssub.s32 128, 128
      %30 = vsyncadd [#allocation6], %s29
      %s31 = sshll.u32 [#allocation5], 4
      %s32 = int_to_ptr.vmem [resolvable:$true] %s31
      %37 = dma.hbm_to_vmem [thread:$0]  %s1, 128, %s32, [#allocation6], 64, 64, 4
    $region9: #{attention_forward.1} parent=1 // pred_fallthru
      _
    // Predicated region
    $region10: #{attention_forward.1} parent=1 // pred_check
      _
    $region11: #{attention_forward.1} parent=1 // pred_check_branch
      %39 = sbr.rel (0) target = $region13
    $region12: #{attention_forward.1} parent=1 // pred_region
      %s41 = ssub.s32 256, 256
      %42 = vsyncadd [#allocation6], %s41
      %s43 = sshll.u32 [#allocation7], 4
      %s44 = int_to_ptr.vmem [resolvable:$true] %s43
      %49 = dma.hbm_to_vmem [thread:$0]  %s2, 256, %s44, [#allocation6], 64, 64, 4
    $region13: #{attention_forward.1} parent=1 // pred_fallthru
      _
    // Predicated region
    $region14: #{attention_forward.1} parent=1 // pred_check
      _
    $region15: #{attention_forward.1} parent=1 // pred_check_branch
      %51 = sbr.rel (0) target = $region17
    $region16: #{attention_forward.1} parent=1 // pred_region
      %s53 = ssub.s32 512, 512
      %54 = vsyncadd [#allocation9], %s53
      %s55 = sshll.u32 [#allocation8], 4
      %s56 = int_to_ptr.vmem [resolvable:$true] %s55
      %61 = dma.hbm_to_vmem [thread:$0]  %s3, 512, %s56, [#allocation9], 64, 64, 4
    $region17: #{attention_forward.1} parent=1 // pred_fallthru
      _
    // Predicated region
    $region18: #{attention_forward.1} parent=1 // pred_check
      _
    $region19: #{attention_forward.1} parent=1 // pred_check_branch
      %63 = sbr.rel (0) target = $region21
    $region20: #{attention_forward.1} parent=1 // pred_region
      %s65 = ssub.s32 16, 16
      %66 = vsyncadd [#allocation9], %s65
      %s68 = sshll.u32 [#allocation10], 4
      %s69 = int_to_ptr.vmem [resolvable:$true] %s68
      %71 = dma.hbm_to_vmem [thread:$0]  %s4, 16, %s69, [#allocation9]
    $region21: #{attention_forward.1} parent=1 // pred_fallthru
      _
    // Predicated region
    $region22: #{attention_forward.1} parent=1 // pred_check
      _
    $region23: #{attention_forward.1} parent=1 // pred_check_branch
      %73 = sbr.rel (0) target = $region25
    $region24: #{attention_forward.1} parent=1 // pred_region
      %s75 = ssub.s32 16, 16
      %76 = vsyncadd [#allocation12], %s75
      %s78 = sshll.u32 [#allocation11], 4
      %s79 = int_to_ptr.vmem [resolvable:$true] %s78
      %81 = dma.hbm_to_vmem [thread:$0]  %s5, 16, %s79, [#allocation12]
    $region25: #{attention_forward.1} parent=1 // pred_fallthru
      _
    // Predicated region
    $region26: #{attention_forward.1} parent=1 // pred_check
      _
    $region27: #{attention_forward.1} parent=1 // pred_check_branch
      %83 = sbr.rel (0) target = $region29
    $region28: #{attention_forward.1} parent=1 // pred_region
      %84 = dma.done [#allocation3], 16
    $region29: #{attention_forward.1} parent=1 // pred_fallthru
      _
    // Predicated region
    $region30: #{attention_forward.1} parent=1 // pred_check
      _
    $region31: #{attention_forward.1} parent=1 // pred_check_branch
      %86 = sbr.rel (0) target = $region33
    $region32: #{attention_forward.1} parent=1 // pred_region
      %87 = dma.done [#allocation6], 128
    $region33: #{attention_forward.1} parent=1 // pred_fallthru
      _
    // Predicated region
    $region34: #{attention_forward.1} parent=1 // pred_check
      _
    $region35: #{attention_forward.1} parent=1 // pred_check_branch
      %89 = sbr.rel (0) target = $region37
    $region36: #{attention_forward.1} parent=1 // pred_region
      %90 = dma.done [#allocation6], 256
    $region37: #{attention_forward.1} parent=1 // pred_fallthru
      _
    // Predicated region
    $region38: #{attention_forward.1} parent=1 // pred_check
      _
    $region39: #{attention_forward.1} parent=1 // pred_check_branch
      %92 = sbr.rel (0) target = $region41
    $region40: #{attention_forward.1} parent=1 // pred_region
      %93 = dma.done [#allocation9], 512
    $region41: #{attention_forward.1} parent=1 // pred_fallthru
      _
    // Predicated region
    $region42: #{attention_forward.1} parent=1 // pred_check
      _
    $region43: #{attention_forward.1} parent=1 // pred_check_branch
      %95 = sbr.rel (0) target = $region45
    $region44: #{attention_forward.1} parent=1 // pred_region
      %96 = dma.done [#allocation9], 16
    $region45: #{attention_forward.1} parent=1 // pred_fallthru
      _
    // Predicated region
    $region46: #{attention_forward.1} parent=1 // pred_check
      _
    $region47: #{attention_forward.1} parent=1 // pred_check_branch
      %98 = sbr.rel (0) target = $region49
    $region48: #{attention_forward.1} parent=1 // pred_region
      %99 = dma.done [#allocation12], 16
    $region49: #{attention_forward.1} parent=1 // pred_fallthru
      _
    %v101 = vld [vmem:[#allocation2] sm:$0x1]
    %v102 = vld [vmem:[#allocation7] sm:$0xf]
    %v103 = vld [vmem:[#allocation7 + $0x4] sm:$0xf]
    %v104 = vld [vmem:[#allocation7 + $0x8] sm:$0xf]
    %v105 = vld [vmem:[#allocation7 + $0xc] sm:$0xf]
    %v106 = vld [vmem:[#allocation10] sm:$0x1]
    %v108 = vlaneseq
    %v109 = vshrl.u32 %v108, 7
    %v110 = vsub.s32 0, %v109
    %v111 = vrot.slane %v106, %v110
    %v117 = vunpack.c.l.b16 %v102
    %v118 = vunpack.c.l.b16 %v103
    %v119 = vunpack.c.l.b16 %v104
    %v120 = vunpack.c.l.b16 %v105
    %v121 = vpack.c.b16 %v118, %v117
    %v122 = vpack.c.b16 %v120, %v119
    %vm125 = vcmask 261120
    %v127 = vsel %vm125, %v101, 0
    %129 = vmatprep.subr.bf16.mxu0 0
    %130 = vmatpush1.bf16.msra.mxu0 %v121
    %131 = vmatprep.subr.bf16.mxu0 0
    %132 = vmatpush1.bf16.msra.mxu0 %v122
    %133 = vmatprep.subr.bf16.mxu0 0
    %134 = vmatpush1.bf16.msra.mxu0 0
    %135 = vmatprep.subr.bf16.mxu0 0
    %136 = vmatpush1.bf16.msra.mxu0 0
    %137 = vmatprep.subr.bf16.mxu0 0
    %138 = vmatpush1.bf16.msra.mxu0 0
    %139 = vmatprep.subr.bf16.mxu0 0
    %140 = vmatpush1.bf16.msra.mxu0 0
    %141 = vmatprep.subr.bf16.mxu0 0
    %142 = vmatpush1.bf16.msra.mxu0 0
    %143 = vmatprep.subr.bf16.mxu0 0
    %144 = vmatpush1.bf16.msra.mxu0 0
    %145 = vmatprep.subr.bf16.mxu0 0
    %146 = vmatpush1.bf16.msra.mxu0 0
    %147 = vmatprep.subr.bf16.mxu0 0
    %148 = vmatpush1.bf16.msra.mxu0 0
    %149 = vmatprep.subr.bf16.mxu0 0
    %150 = vmatpush1.bf16.msra.mxu0 0
    %151 = vmatprep.subr.bf16.mxu0 0
    %152 = vmatpush1.bf16.msra.mxu0 0
    %153 = vmatprep.subr.bf16.mxu0 0
    %154 = vmatpush1.bf16.msra.mxu0 0
    %155 = vmatprep.subr.bf16.mxu0 0
    %156 = vmatpush1.bf16.msra.mxu0 0
    %157 = vmatprep.subr.bf16.mxu0 0
    %158 = vmatpush1.bf16.msra.mxu0 0
    %159 = vmatprep.subr.bf16.mxu0 0
    %160 = vmatpush1.bf16.msra.mxu0 0
    %161 = vmatprep.mubr.bf16.mxu0 0
    %162 = vmatmul.mubr.bf16.gmra.mrb[0].mxu0 %v127
    %v163 = vpop.f32.mrb[0].mxu0
    %v164 = vadd.f32 %v111, %v163
    %v165 = vpop.f32.mrb[0].mxu0
    %v166 = vpop.f32.mrb[0].mxu0
    %v167 = vpop.f32.mrb[0].mxu0
    %168 = vdwg.mxu0
    %v169 = vld [vmem:[#allocation5] sm:$0xf]
    %v170 = vld [vmem:[#allocation5 + $0x4] sm:$0xf]
    %v171 = vld [vmem:[#allocation8] sm:$0xf]
    %v172 = vld [vmem:[#allocation8 + $0x4] sm:$0xf]
    %v173 = vld [vmem:[#allocation8 + $0x8] sm:$0xf]
    %v174 = vld [vmem:[#allocation8 + $0xc] sm:$0xf]
    %v175 = vld [vmem:[#allocation8 + $0x10] sm:$0xf]
    %v176 = vld [vmem:[#allocation8 + $0x14] sm:$0xf]
    %v177 = vld [vmem:[#allocation8 + $0x18] sm:$0xf]
    %v178 = vld [vmem:[#allocation8 + $0x1c] sm:$0xf]
    %v181 = vunpack.c.l.b16 %v169
    %v182 = vunpack.c.l.b16 %v170
    %v183 = vpack.c.b16 %v182, %v181
    %v192 = vunpack.c.l.b16 %v171
    %v193 = vunpack.c.l.b16 %v172
    %v194 = vunpack.c.l.b16 %v173
    %v195 = vunpack.c.l.b16 %v174
    %v196 = vunpack.c.l.b16 %v175
    %v197 = vunpack.c.l.b16 %v176
    %v198 = vunpack.c.l.b16 %v177
    %v199 = vunpack.c.l.b16 %v178
    %v200 = vpack.c.b16 %v193, %v192
    %v201 = vpack.c.b16 %v195, %v194
    %v202 = vpack.c.b16 %v197, %v196
    %v203 = vpack.c.b16 %v199, %v198
    %v209 = vcombine.low %v164, %v164
    %v211 = vunpack.c.l.s4 1983009808
    %v212 = vunpack.c.0.s8 %v211
    %v213 = vlaneseq
    %v214 = vshrl.u32 %v213, 7
    %v215 = vsub.s32 %v212, %v214
    %v216 = vrot.slane %v209, %v215
    %v217 = vcombine.low %v216, %v216
    %vm219 = vcmask 523264
    %v221 = vsel %vm219, %v183, 0
    %223 = vmatprep.subr.bf16.mxu0 0
    %224 = vmatpush1.bf16.msra.mxu0 %v200
    %225 = vmatprep.subr.bf16.mxu0 0
    %226 = vmatpush1.bf16.msra.mxu0 %v201
    %227 = vmatprep.subr.bf16.mxu0 0
    %228 = vmatpush1.bf16.msra.mxu0 %v202
    %229 = vmatprep.subr.bf16.mxu0 0
    %230 = vmatpush1.bf16.msra.mxu0 %v203
    %231 = vmatprep.subr.bf16.mxu0 0
    %232 = vmatpush1.bf16.msra.mxu0 0
    %233 = vmatprep.subr.bf16.mxu0 0
    %234 = vmatpush1.bf16.msra.mxu0 0
    %235 = vmatprep.subr.bf16.mxu0 0
    %236 = vmatpush1.bf16.msra.mxu0 0
    %237 = vmatprep.subr.bf16.mxu0 0
    %238 = vmatpush1.bf16.msra.mxu0 0
    %239 = vmatprep.subr.bf16.mxu0 0
    %240 = vmatpush1.bf16.msra.mxu0 0
    %241 = vmatprep.subr.bf16.mxu0 0
    %242 = vmatpush1.bf16.msra.mxu0 0
    %243 = vmatprep.subr.bf16.mxu0 0
    %244 = vmatpush1.bf16.msra.mxu0 0
    %245 = vmatprep.subr.bf16.mxu0 0
    %246 = vmatpush1.bf16.msra.mxu0 0
    %247 = vmatprep.subr.bf16.mxu0 0
    %248 = vmatpush1.bf16.msra.mxu0 0
    %249 = vmatprep.subr.bf16.mxu0 0
    %250 = vmatpush1.bf16.msra.mxu0 0
    %251 = vmatprep.subr.bf16.mxu0 0
    %252 = vmatpush1.bf16.msra.mxu0 0
    %253 = vmatprep.subr.bf16.mxu0 0
    %254 = vmatpush1.bf16.msra.mxu0 0
    %255 = vmatprep.mubr.bf16.mxu0 0
    %256 = vmatmul.mubr.bf16.gmra.mrb[0].mxu0 %v221
    %v257 = vpop.f32.mrb[0].mxu0
    %v258 = vadd.f32 %v217, %v257
    %v259 = vpop.f32.mrb[0].mxu0
    %v260 = vpop.f32.mrb[0].mxu0
    %v261 = vadd.f32 %v217, %v260
    %v262 = vpop.f32.mrb[0].mxu0
    %263 = vdwg.mxu0
    %v264 = vtanh.pop %v258
    %v265 = vtanh.pop %v261
    %v266 = vld [vmem:[#allocation11] sm:$0x1]
    %v268 = vlaneseq
    %v269 = vshrl.u32 %v268, 7
    %v270 = vsub.s32 0, %v269
    %v271 = vrot.slane %v266, %v270
    %v273 = vmul.f32 %v264, %v271
    %v274 = vmul.f32 %v265, %v271
    %v275 = vsel %vm125, %v273, 0.0
    %276 = vadd.xlane.f32.xlu0 %v275
    %v277 = vpop.xlane.xlu0 %276
    %v278 = vsel %vm125, %v274, 0.0
    %279 = vadd.xlane.f32.xlu0 %v278
    %v280 = vpop.xlane.xlu0 %279
    %v284 = vunpack.c.l.s4 269488144
    %v285 = vunpack.c.0.s8 %v284
    %v286 = vlaneseq
    %v287 = vshrl.u32 %v286, 7
    %v288 = vsub.s32 %v285, %v287
    %v289 = vrot.slane %v277, %v288
    %v291 = vunpack.c.l.s4 842150450
    %v292 = vunpack.c.0.s8 %v291
    %v293 = vlaneseq
    %v294 = vshrl.u32 %v293, 7
    %v295 = vsub.s32 %v292, %v294
    %v296 = vrot.slane %v277, %v295
    %v298 = vunpack.c.l.s4 1414812756
    %v299 = vunpack.c.0.s8 %v298
    %v300 = vlaneseq
    %v301 = vshrl.u32 %v300, 7
    %v302 = vsub.s32 %v299, %v301
    %v303 = vrot.slane %v277, %v302
    %v305 = vunpack.c.l.s4 1987475062
    %v306 = vunpack.c.0.s8 %v305
    %v307 = vlaneseq
    %v308 = vshrl.u32 %v307, 7
    %v309 = vsub.s32 %v306, %v308
    %v310 = vrot.slane %v277, %v309
    %v312 = vunpack.c.l.s4 269488144
    %v313 = vunpack.c.0.s8 %v312
    %v314 = vlaneseq
    %v315 = vshrl.u32 %v314, 7
    %v316 = vsub.s32 %v313, %v315
    %v317 = vrot.slane %v280, %v316
    %v319 = vunpack.c.l.s4 842150450
    %v320 = vunpack.c.0.s8 %v319
    %v321 = vlaneseq
    %v322 = vshrl.u32 %v321, 7
    %v323 = vsub.s32 %v320, %v322
    %v324 = vrot.slane %v280, %v323
    %v326 = vunpack.c.l.s4 1414812756
    %v327 = vunpack.c.0.s8 %v326
    %v328 = vlaneseq
    %v329 = vshrl.u32 %v328, 7
    %v330 = vsub.s32 %v327, %v329
    %v331 = vrot.slane %v280, %v330
    %v333 = vunpack.c.l.s4 1987475062
    %v334 = vunpack.c.0.s8 %v333
    %v335 = vlaneseq
    %v336 = vshrl.u32 %v335, 7
    %v337 = vsub.s32 %v334, %v336
    %v338 = vrot.slane %v280, %v337
    %v340 = vunpack.c.l.s4 1983009808
    %v341 = vunpack.c.0.s8 %v340
    %v342 = vlaneseq
    %v343 = vshrl.u32 %v342, 7
    %v344 = vsub.s32 %v341, %v343
    %v345 = vrot.slane %v289, %v344
    %v347 = vunpack.c.l.s4 1983009808
    %v348 = vunpack.c.0.s8 %v347
    %v349 = vlaneseq
    %v350 = vshrl.u32 %v349, 7
    %v351 = vsub.s32 %v348, %v350
    %v352 = vrot.slane %v296, %v351
    %v354 = vunpack.c.l.s4 1983009808
    %v355 = vunpack.c.0.s8 %v354
    %v356 = vlaneseq
    %v357 = vshrl.u32 %v356, 7
    %v358 = vsub.s32 %v355, %v357
    %v359 = vrot.slane %v303, %v358
    %v361 = vunpack.c.l.s4 1983009808
    %v362 = vunpack.c.0.s8 %v361
    %v363 = vlaneseq
    %v364 = vshrl.u32 %v363, 7
    %v365 = vsub.s32 %v362, %v364
    %v366 = vrot.slane %v310, %v365
    %v368 = vunpack.c.l.s4 1983009808
    %v369 = vunpack.c.0.s8 %v368
    %v370 = vlaneseq
    %v371 = vshrl.u32 %v370, 7
    %v372 = vsub.s32 %v369, %v371
    %v373 = vrot.slane %v317, %v372
    %v375 = vunpack.c.l.s4 1983009808
    %v376 = vunpack.c.0.s8 %v375
    %v377 = vlaneseq
    %v378 = vshrl.u32 %v377, 7
    %v379 = vsub.s32 %v376, %v378
    %v380 = vrot.slane %v324, %v379
    %v382 = vunpack.c.l.s4 1983009808
    %v383 = vunpack.c.0.s8 %v382
    %v384 = vlaneseq
    %v385 = vshrl.u32 %v384, 7
    %v386 = vsub.s32 %v383, %v385
    %v387 = vrot.slane %v331, %v386
    %v389 = vunpack.c.l.s4 1983009808
    %v390 = vunpack.c.0.s8 %v389
    %v391 = vlaneseq
    %v392 = vshrl.u32 %v391, 7
    %v393 = vsub.s32 %v390, %v392
    %v394 = vrot.slane %v338, %v393
    %395 = vset.pattern.permute.xlu0 0
    %396 = vperm.xlu0 %395, %v345
    %v397 = vpop.permute.xlu0 %396
    %398 = vset.pattern.permute.xlu0 0
    %399 = vperm.xlu0 %398, %v352
    %v400 = vpop.permute.xlu0 %399
    %401 = vset.pattern.permute.xlu0 0
    %402 = vperm.xlu0 %401, %v359
    %v403 = vpop.permute.xlu0 %402
    %404 = vset.pattern.permute.xlu0 0
    %405 = vperm.xlu0 %404, %v366
    %v406 = vpop.permute.xlu0 %405
    %407 = vset.pattern.permute.xlu0 0
    %408 = vperm.xlu0 %407, %v373
    %v409 = vpop.permute.xlu0 %408
    %410 = vset.pattern.permute.xlu0 0
    %411 = vperm.xlu0 %410, %v380
    %v412 = vpop.permute.xlu0 %411
    %413 = vset.pattern.permute.xlu0 0
    %414 = vperm.xlu0 %413, %v387
    %v415 = vpop.permute.xlu0 %414
    %416 = vset.pattern.permute.xlu0 0
    %417 = vperm.xlu0 %416, %v394
    %v418 = vpop.permute.xlu0 %417
    %v419 = vlaneseq
    %v420 = vand.u32 %v419, 127
    %v421 = vlaneseq
    %v422 = vshrl.u32 %v421, 7
    %v423 = vsub.s32 %v420, %v422
    %v424 = vrot.slane %v397, %v423
    %v425 = vlaneseq
    %v426 = vshrl.u32 %v425, 7
    %v427 = vsub.s32 %v420, %v426
    %v428 = vrot.slane %v400, %v427
    %v429 = vlaneseq
    %v430 = vshrl.u32 %v429, 7
    %v431 = vsub.s32 %v420, %v430
    %v432 = vrot.slane %v403, %v431
    %v433 = vlaneseq
    %v434 = vshrl.u32 %v433, 7
    %v435 = vsub.s32 %v420, %v434
    %v436 = vrot.slane %v406, %v435
    %v437 = vlaneseq
    %v438 = vshrl.u32 %v437, 7
    %v439 = vsub.s32 %v420, %v438
    %v440 = vrot.slane %v409, %v439
    %v441 = vlaneseq
    %v442 = vshrl.u32 %v441, 7
    %v443 = vsub.s32 %v420, %v442
    %v444 = vrot.slane %v412, %v443
    %v445 = vlaneseq
    %v446 = vshrl.u32 %v445, 7
    %v447 = vsub.s32 %v420, %v446
    %v448 = vrot.slane %v415, %v447
    %v449 = vlaneseq
    %v450 = vshrl.u32 %v449, 7
    %v451 = vsub.s32 %v420, %v450
    %v452 = vrot.slane %v418, %v451
    %vm453 = vcmask 1041409
    %v454 = vsel %vm453, %v428, %v424
    %vm455 = vcmask 1042434
    %v456 = vsel %vm455, %v432, %v454
    %vm457 = vcmask 1043459
    %v458 = vsel %vm457, %v436, %v456
    %vm459 = vcmask 1044484
    %v460 = vsel %vm459, %v440, %v458
    %vm461 = vcmask 1045509
    %v462 = vsel %vm461, %v444, %v460
    %vm463 = vcmask 1046534
    %v464 = vsel %vm463, %v448, %v462
    %vm465 = vcmask 1047559
    %v466 = vsel %vm465, %v452, %v464
    %468 = vxpose.xlu0.b32.start [1/16] %v466, 128
    %469 = vxpose.xlu0.b32.cont [2/16] 0.0, 128
    %470 = vxpose.xlu0.b32.cont [3/16] 0.0, 128
    %471 = vxpose.xlu0.b32.cont [4/16] 0.0, 128
    %472 = vxpose.xlu0.b32.cont [5/16] 0.0, 128
    %473 = vxpose.xlu0.b32.cont [6/16] 0.0, 128
    %474 = vxpose.xlu0.b32.cont [7/16] 0.0, 128
    %475 = vxpose.xlu0.b32.cont [8/16] 0.0, 128
    %476 = vxpose.xlu0.b32.cont [9/16] 0.0, 128
    %477 = vxpose.xlu0.b32.cont [10/16] 0.0, 128
    %478 = vxpose.xlu0.b32.cont [11/16] 0.0, 128
    %479 = vxpose.xlu0.b32.cont [12/16] 0.0, 128
    %480 = vxpose.xlu0.b32.cont [13/16] 0.0, 128
    %481 = vxpose.xlu0.b32.cont [14/16] 0.0, 128
    %482 = vxpose.xlu0.b32.cont [15/16] 0.0, 128
    %483 = vxpose.xlu0.b32.end [16/16] 0.0, 128
    %v484 = vpop.trf.xlu0
    %v485 = vpop.trf.xlu0
    %v486 = vpop.trf.xlu0
    %v487 = vpop.trf.xlu0
    %v488 = vpop.trf.xlu0
    %v489 = vpop.trf.xlu0
    %v490 = vpop.trf.xlu0
    %v491 = vpop.trf.xlu0
    %v492 = vpop.trf.xlu0
    %v493 = vpop.trf.xlu0
    %v494 = vpop.trf.xlu0
    %v495 = vpop.trf.xlu0
    %v496 = vpop.trf.xlu0
    %v497 = vpop.trf.xlu0
    %v498 = vpop.trf.xlu0
    %v499 = vpop.trf.xlu0
    %vm500 = vcmask 58368
    %v501 = vsel %vm500, %v484, -inf
    %502 = vmax.xlane.f32.xlu0 %v501
    %v503 = vpop.xlane.xlu0 %502
    %v504 = vsub.f32 %v484, %v503
    %v505 = vmul.f32 %v504, 1.442695
    %v506 = vpow.pop %v505
    %v507 = vsel %vm500, %v506, 0.0
    %508 = vadd.xlane.f32.xlu0 %v507
    %v509 = vpop.xlane.xlu0 %508
    %v510 = vrcp.pop %v509
    %v511 = vmul.f32 %v506, %v510
    %512 = vst.msk [vmem:[#allocation13] sm:$0x3] %vm500, %v511
    // Predicated region
    $region50: #{attention_forward.1} parent=1 // pred_check
      _
    $region51: #{attention_forward.1} parent=1 // pred_check_branch
      %514 = sbr.rel (0) target = $region53
    $region52: #{attention_forward.1} parent=1 // pred_region
      %s516 = ssub.s32 32, 32
      %517 = vsyncadd [#allocation4], %s516
      %s519 = sshll.u32 [#allocation13], 4
      %s520 = int_to_ptr.vmem [resolvable:$true] %s519
      %522 = dma.vmem_to_hbm [thread:$0]  %s520, 32, %s6, [#allocation4]
    $region53: #{attention_forward.1} parent=1 // pred_fallthru
      _
    // Predicated region
    $region54: #{attention_forward.1} parent=1 // pred_check
      _
    $region55: #{attention_forward.1} parent=1 // pred_check_branch
      %524 = sbr.rel (0) target = $region57
    $region56: #{attention_forward.1} parent=1 // pred_region
      %525 = dma.done [#allocation4], 32
    $region57: #{attention_forward.1} parent=1 // pred_fallthru
      _
    %526 = vsyncpa [#allocation3], 1
    %527 = vsyncpa [#allocation6], 1
    %528 = vsyncpa [#allocation9], 1
    %529 = vsyncpa [#allocation12], 1
    %530 = vsyncpa [#allocation4], 1

</llo_original>
